<compile_context>
chip_gen: v7x
topology: tpu7x:2x2x1
jax: 0.10.0
libtpu: 0.0.40
codegen_flags: <defaults>
</compile_context>

<pallas_src>
import jax
import jax.numpy as jnp
import numpy as np
from jax.experimental import pallas as pl
from jax.experimental.pallas import tpu as pltpu


# ------------------------------ kernel ------------------------------------ #
def conv_matmul_kernel(w_ref, p_ref, o_ref):
    """Per-batch 3x3 conv as a single MXU matmul.

    w_ref: (Cout, K)       flattened conv weight (K = 9*Cin, zero padded)
    p_ref: (1, K, H*W)     im2col patches for this batch element
    o_ref: (1, Cout, H*W)  conv output, NCHW-flat (lane-dense last dim)
    """
    o_ref[0] = jnp.dot(w_ref[...], p_ref[0],
                       preferred_element_type=jnp.float32)


# ------------------------------ wrapper ------------------------------------ #
@jax.jit
def model_forward(x_nchw, w_oihw):
    N, Cin, H, W = x_nchw.shape
    Cout, _, KH, KW = w_oihw.shape
    HW = H * W
    K = KH * KW * Cin              # 27
    K_pad = 32                     # pad the contraction dim to a clean size

    # ---- layout plumbing (wrapper-side XLA glue) -------------------------- #
    # im2col: patches[n, tap*Cin + ci, h*W + w] = x_pad[n, ci, h+kh, w+kw]
    x_pad = jnp.pad(x_nchw, ((0, 0), (0, 0), (1, 1), (1, 1)))
    taps = [
        x_pad[:, :, kh:kh + H, kw:kw + W].reshape(N, Cin, HW)
        for kh in range(KH) for kw in range(KW)
    ]
    patches = jnp.concatenate(taps, axis=1)                    # (N, K, HW)
    patches = jnp.pad(patches, ((0, 0), (0, K_pad - K), (0, 0)))

    # weight: OIHW -> (Cout, kh, kw, ci) -> (Cout, K) -> pad to (Cout, K_pad)
    w_mat = jnp.transpose(w_oihw, (0, 2, 3, 1)).reshape(Cout, K)
    w_mat = jnp.pad(w_mat, ((0, 0), (0, K_pad - K)))

    # ---- single fused Pallas call ----------------------------------------- #
    out_flat = pl.pallas_call(
        conv_matmul_kernel,
        out_shape=jax.ShapeDtypeStruct((N, Cout, HW), jnp.float32),
        grid=(N,),
        in_specs=[
            pl.BlockSpec((Cout, K_pad), lambda n: (0, 0)),
            pl.BlockSpec((1, K_pad, HW), lambda n: (n, 0, 0)),
        ],
        out_specs=pl.BlockSpec((1, Cout, HW), lambda n: (n, 0, 0)),
        compiler_params=pltpu.CompilerParams(
            dimension_semantics=("parallel",)),
        cost_estimate=pl.CostEstimate(
            flops=2 * N * Cout * K_pad * HW,
            transcendentals=0,
            bytes_accessed=4 * (N * K_pad * HW + Cout * K_pad + N * Cout * HW)),
    )(w_mat, patches)

    # free reshape of contiguous trailing dim -> NCHW [N, Cout, H, W]
    return out_flat.reshape(N, Cout, H, W)


# ------------------------------ reference ---------------------------------- #
def reference(x_nchw, w_oihw):
    return jax.lax.conv_general_dilated(
        x_nchw, w_oihw, window_strides=(1, 1), padding=((1, 1), (1, 1)),
        dimension_numbers=('NCHW', 'OIHW', 'NCHW'))


# -------------------------------- main -------------------------------------- #
if __name__ == "__main__":
    key = jax.random.PRNGKey(0)
    kx, kw = jax.random.split(key)

    N, Cin, H, W = 2, 3, 16, 16     # shapes implied by the module's forward
    Cout = 32

    x = jax.random.normal(kx, (N, Cin, H, W), jnp.float32)
    w = jax.random.normal(kw, (Cout, Cin, 3, 3), jnp.float32) * 0.1  # conv1.weight

    out = jax.block_until_ready(model_forward(x, w))
    ref = reference(x, w)

    assert out.shape == (N, Cout, H, W)
    np.testing.assert_allclose(np.asarray(out), np.asarray(ref),
                               atol=1e-4, rtol=1e-4)
    print("KERNEL_OK")
</pallas_src>

<mosaic_0001>
module attributes {stable_mosaic.version = 11 : i64} {
  func.func @conv_matmul_kernel(%arg0: i32, %arg1: memref<32x32xf32, #tpu.memory_space<vmem>>, %arg2: memref<1x32x256xf32, #tpu.memory_space<vmem>>, %arg3: memref<1x32x256xf32, #tpu.memory_space<vmem>>) attributes {dimension_semantics = [#tpu.dimension_semantics<parallel>], iteration_bounds = array<i64: 2>, scalar_prefetch = 0 : i64, scratch_operands = 0 : i64, tpu.core_type = #tpu.core_type<tc>, window_params = [{pipeline_mode = #tpu.pipeline_mode<synchronous>, transform_indices = @transform_0, window_bounds = array<i64: 32, 32>}, {transform_indices = @transform_1, window_bounds = array<i64: 1, 32, 256>}, {transform_indices = @transform_2, window_bounds = array<i64: 1, 32, 256>}]} {
    %c0 = arith.constant 0 : index
    %c0_0 = arith.constant 0 : index
    %0 = vector.load %arg1[%c0, %c0_0] : memref<32x32xf32, #tpu.memory_space<vmem>>, vector<32x32xf32>
    %c0_1 = arith.constant 0 : index
    %c0_2 = arith.constant 0 : index
    %c0_3 = arith.constant 0 : index
    %1 = vector.load %arg2[%c0_1, %c0_2, %c0_3] : memref<1x32x256xf32, #tpu.memory_space<vmem>>, vector<1x32x256xf32>
    %2 = vector.shape_cast %1 : vector<1x32x256xf32> to vector<32x256xf32>
    %cst = arith.constant dense<0.000000e+00> : vector<32x256xf32>
    %3 = tpu.matmul %0, %2, %cst {dimension_numbers = #tpu.dot_dimension_numbers<[1], [0], [0], [1], [0, 0, 1, 1], [], []>} : vector<32x32xf32>, vector<32x256xf32>, vector<32x256xf32> -> vector<32x256xf32>
    %c0_4 = arith.constant 0 : index
    %c0_5 = arith.constant 0 : index
    %c0_6 = arith.constant 0 : index
    %4 = vector.load %arg3[%c0_4, %c0_5, %c0_6] : memref<1x32x256xf32, #tpu.memory_space<vmem>>, vector<1x32x256xf32>
    %5 = vector.shape_cast %4 : vector<1x32x256xf32> to vector<32x256xf32>
    %6 = vector.shape_cast %3 : vector<32x256xf32> to vector<1x32x256xf32>
    tpu.vector_store %arg3[%c0_4, %c0_5, %c0_6], %6 {strides = array<i32>} : memref<1x32x256xf32, #tpu.memory_space<vmem>>, vector<1x32x256xf32>,
    return
  }
  func.func @transform_0(%arg0: i32) -> (i32, i32) {
    %c0_i32 = arith.constant 0 : i32
    %c0_i32_0 = arith.constant 0 : i32
    %c0_i32_1 = arith.constant 0 : i32
    return %c0_i32, %c0_i32_0 : i32, i32
  }
  func.func @transform_1(%arg0: i32) -> (i32, i32, i32) {
    %c0_i32 = arith.constant 0 : i32
    %c0_i32_0 = arith.constant 0 : i32
    %c0_i32_1 = arith.constant 0 : i32
    return %arg0, %c0_i32, %c0_i32_0 : i32, i32, i32
  }
  func.func @transform_2(%arg0: i32) -> (i32, i32, i32) {
    %c0_i32 = arith.constant 0 : i32
    %c0_i32_0 = arith.constant 0 : i32
    %c0_i32_1 = arith.constant 0 : i32
    return %arg0, %c0_i32, %c0_i32_0 : i32, i32, i32
  }
}

</mosaic_0001>

<llo_original>
// kernel: model_forward.1
$region0: #{model_forward.1}
  #allocation0 [shape = 'u32[]', space=smem, size = 0x4, offset = 0x4, fixed_abs, tag = 'smem constant byte address 0x4 - core index']
  #allocation1 [shape = 'u32[144,128]{1,0:T(1,128)}', space=vmem, size = 0x12000, scoped, tag = 'internal scratch']
  %s0 = inlined_call_operand.vmem [shape: f32[32,32], index: 0, kind: input, shape index: {}]
  %s1 = inlined_call_operand.vmem [shape: f32[2,32,256], index: 1, kind: input, shape index: {}]
  %s2 = inlined_call_operand.vmem [shape: f32[2,32,256], index: 2, kind: output, shape index: {}]
  %s3 = sld [smem:[#allocation0]]
  $region41: #{model_forward.1} parent=0
    _
  %s5 = ssub.s32 1, %s3
  %s6 = scalar_select 0, %s5, %s3
  loop: start=0, step=1, limit=4
  $region2: #{model_forward.1} parent=0 // loop_pre_header
    _
  $region3: #{model_forward.1} parent=0 // loop_header
    %s8 = sphi 0, %s12
    %p9 = scmp.ge.s32.totalorder %s8, 4
    %s16 = sphi 0, %s16
    %s18 = sphi 0, %s16
    %s19 = sphi 0, %s18
    %s33 = sphi 0, %s19
    %s39 = sphi 0, %s41
    %s42 = sphi 0, %s39
    %s43 = sphi 0, %s42
    %s59 = sphi 0, %s43
    %s65 = sphi 0, %s67
    %s68 = sphi 0, %s65
    %s69 = sphi 0, %s68
    %s85 = sphi 0, %s69
  $region4: #{model_forward.1} parent=0 // loop_header_branch
    %11 = sbr.rel (%p9) target = $region8
  $region5: #{model_forward.1} parent=0 // loop_body
    %s13 = ssub.s32 %s8, 1
    %s14 = ssub.s32 %s8, 2
    %s15 = sadd.s32 %s8, 1
    %s17 = sadd.s32 %s16, 1
    %p20 = scmp.eq.s32.totalorder %s8, 1
    %p21 = scmp.ne.s32.totalorder %s16, %s18
    %p22 = scmp.eq.s32.totalorder %s8, 0
    %p23 = por %p21, %p22
    %p24 = scmp.ne.s32.totalorder %s16, %s18
    %p25 = scmp.eq.s32.totalorder %s13, 1
    %p26 = por %p24, %p25
    %p27 = scmp.ne.s32.totalorder %s18, %s19
    %p28 = scmp.eq.s32.totalorder %s13, 0
    %p29 = por %p27, %p28
    %p30 = scmp.ne.s32.totalorder %s18, %s19
    %p31 = scmp.eq.s32.totalorder %s14, 1
    %p32 = por %p30, %p31
    %p34 = scmp.ne.s32.totalorder %s19, %s33
    %p35 = scmp.eq.s32.totalorder %s14, 0
    %p36 = por %p34, %p35
    %s37 = ssub.s32 %s8, %s15
    %p38 = scmp.eq.s32.totalorder %s37, 0
    %s40 = sadd.s32 %s39, 1
    %s41 = scalar_select %p38, %s39, %s40
    %p44 = pneg %p38
    %p45 = scmp.eq.s32.totalorder %s8, 1
    %p46 = por %p44, %p45
    %p47 = scmp.ne.s32.totalorder %s39, %s42
    %p48 = scmp.eq.s32.totalorder %s8, 0
    %p49 = por %p47, %p48
    %p50 = scmp.ne.s32.totalorder %s39, %s42
    %p51 = scmp.eq.s32.totalorder %s13, 1
    %p52 = por %p50, %p51
    %p53 = scmp.ne.s32.totalorder %s42, %s43
    %p54 = scmp.eq.s32.totalorder %s13, 0
    %p55 = por %p53, %p54
    %p56 = scmp.ne.s32.totalorder %s42, %s43
    %p57 = scmp.eq.s32.totalorder %s14, 1
    %p58 = por %p56, %p57
    %p60 = scmp.ne.s32.totalorder %s43, %s59
    %p61 = scmp.eq.s32.totalorder %s14, 0
    %p62 = por %p60, %p61
    %s63 = ssub.s32 %s8, %s15
    %p64 = scmp.eq.s32.totalorder %s63, 0
    %s66 = sadd.s32 %s65, 1
    %s67 = scalar_select %p64, %s65, %s66
    %p70 = pneg %p64
    %p71 = scmp.eq.s32.totalorder %s8, 1
    %p72 = por %p70, %p71
    %p73 = scmp.ne.s32.totalorder %s65, %s68
    %p74 = scmp.eq.s32.totalorder %s8, 0
    %p75 = por %p73, %p74
    %p76 = scmp.ne.s32.totalorder %s65, %s68
    %p77 = scmp.eq.s32.totalorder %s13, 1
    %p78 = por %p76, %p77
    %p79 = scmp.ne.s32.totalorder %s68, %s69
    %p80 = scmp.eq.s32.totalorder %s13, 0
    %p81 = por %p79, %p80
    %p82 = scmp.ne.s32.totalorder %s68, %s69
    %p83 = scmp.eq.s32.totalorder %s14, 1
    %p84 = por %p82, %p83
    %p86 = scmp.ne.s32.totalorder %s69, %s85
    %p87 = scmp.eq.s32.totalorder %s14, 0
    %p88 = por %p86, %p87
    %p89 = scmp.le.s32.totalorder 1, %s8
    %p90 = scmp.lt.s32.totalorder %s8, 3
    %p91 = pnand %p89, %p90
    %p92 = pneg %p91
    // Predicated region
    $region9: #{model_forward.1} parent=5 // pred_check
      _
    $region10: #{model_forward.1} parent=5 // pred_check_branch
      %94 = sbr.rel (%p91) target = $region12
    $region11: #{model_forward.1} parent=5 // pred_region
      %s95 = ssub.s32 %s8, 1
      // Predicated region
      $region13: #{model_forward.1} parent=11 // pred_check
        %p96 = pneg %p29
      $region14: #{model_forward.1} parent=11 // pred_check_branch
        %98 = sbr.rel (%p96) target = $region16
      $region15: #{model_forward.1} parent=11 // pred_region
        _
      $region16: #{model_forward.1} parent=11 // pred_fallthru
        _
    $region12: #{model_forward.1} parent=5 // pred_fallthru
      _
    %p99 = scmp.lt.s32.totalorder %s8, 2
    // Predicated region
    $region17: #{model_forward.1} parent=5 // pred_check
      %p100 = pneg %p99
    $region18: #{model_forward.1} parent=5 // pred_check_branch
      %102 = sbr.rel (%p100) target = $region20
    $region19: #{model_forward.1} parent=5 // pred_region
      // Predicated region
      $region21: #{model_forward.1} parent=19 // pred_check
        %p103 = pneg %p49
      $region22: #{model_forward.1} parent=19 // pred_check_branch
        %105 = sbr.rel (%p103) target = $region24
      $region23: #{model_forward.1} parent=19 // pred_region
        %p106 = scmp.lt.s32.totalorder %s8, 1
        %s107 = scalar_select %p106, %s8, 1
        %s108 = smul.addr %s107, 8
        %s109 = smul.addr %s108, 8
        %s110 = scalar_lea.vmem %s1, %s109
      $region24: #{model_forward.1} parent=19 // pred_fallthru
        _
    $region20: #{model_forward.1} parent=5 // pred_fallthru
      _
    %p111 = scmp.le.s32.totalorder 1, %s8
    %p112 = scmp.lt.s32.totalorder %s8, 3
    %p113 = pnand %p111, %p112
    %p114 = pneg %p113
    // Predicated region
    $region25: #{model_forward.1} parent=5 // pred_check
      _
    $region26: #{model_forward.1} parent=5 // pred_check_branch
      %116 = sbr.rel (%p113) target = $region28
    $region27: #{model_forward.1} parent=5 // pred_region
      %s117 = ssub.s32 %s8, 1
      %p118 = pneg %p29
      %p119 = pneg %p26
      %p120 = scmp.lt.s32.totalorder %s13, 1
      %s121 = scalar_select %p120, %s13, 1
      %s122 = smul.addr %s121, 8
      %s123 = smul.addr %s122, 8
      %s124 = scalar_lea.vmem %s1, %s123
      %p125 = pneg %p55
      %p126 = pneg %p52
      %p127 = pneg %p81
      %p128 = pneg %p78
      %p129 = scmp.lt.s32.totalorder %s13, 1
      %s130 = scalar_select %p129, %s13, 1
      %s131 = smul.addr %s130, 8
      %s132 = smul.addr %s131, 8
      %s133 = scalar_lea.vmem %s2, %s132
      %p134 = scmp.lt.s32.totalorder %s13, 1
      %s135 = scalar_select %p134, %s13, 1
      %s136 = smul.addr %s135, 8
      %s137 = smul.addr %s136, 8
      %s138 = scalar_lea.vmem %s1, %s137
      %p139 = scmp.lt.s32.totalorder %s13, 1
      %s140 = scalar_select %p139, %s13, 1
      %s141 = smul.addr %s140, 8
      %s142 = smul.addr %s141, 8
      %s143 = scalar_lea.vmem %s2, %s142
      %v144 = vld [vmem:[%s0] sm:$0xff]
      %v145 = vld [vmem:[%s0 + $0x8] sm:$0xff]
      %v146 = vld [vmem:[%s0 + $0x10] sm:$0xff]
      %v147 = vld [vmem:[%s0 + $0x18] sm:$0xff]
      %v148 = vld [vmem:[%s138] sm:$0xff]
      %v149 = vld [vmem:[%s138 + $0x8] sm:$0xff]
      %v150 = vld [vmem:[%s138 + $0x10] sm:$0xff]
      %v151 = vld [vmem:[%s138 + $0x18] sm:$0xff]
      %v152 = vld [vmem:[%s138 + $0x20] sm:$0xff]
      %v153 = vld [vmem:[%s138 + $0x28] sm:$0xff]
      %v154 = vld [vmem:[%s138 + $0x30] sm:$0xff]
      %v155 = vld [vmem:[%s138 + $0x38] sm:$0xff]
      %vm156 = vcmask 261120
      %v158 = vsel %vm156, %v144, 0
      %v161 = vsel %vm156, %v145, 0
      %v164 = vsel %vm156, %v146, 0
      %v167 = vsel %vm156, %v147, 0
      %169 = vmatprep.subr.mxu0 %v149
      %170 = vmatpush1.msra.mxu0 %v148
      %171 = vmatprep.subr.mxu0 %v151
      %172 = vmatpush1.msra.mxu0 %v150
      %173 = vmatprep.subr.mxu0 %v153
      %174 = vmatpush1.msra.mxu0 %v152
      %175 = vmatprep.subr.mxu0 %v155
      %176 = vmatpush1.msra.mxu0 %v154
      %177 = vmatprep.subr.mxu0 0.0
      %178 = vmatpush1.msra.mxu0 0.0
      %179 = vmatprep.subr.mxu0 0.0
      %180 = vmatpush1.msra.mxu0 0.0
      %181 = vmatprep.subr.mxu0 0.0
      %182 = vmatpush1.msra.mxu0 0.0
      %183 = vmatprep.subr.mxu0 0.0
      %184 = vmatpush1.msra.mxu0 0.0
      %185 = vmatprep.subr.mxu0 0.0
      %186 = vmatpush1.msra.mxu0 0.0
      %187 = vmatprep.subr.mxu0 0.0
      %188 = vmatpush1.msra.mxu0 0.0
      %189 = vmatprep.subr.mxu0 0.0
      %190 = vmatpush1.msra.mxu0 0.0
      %191 = vmatprep.subr.mxu0 0.0
      %192 = vmatpush1.msra.mxu0 0.0
      %193 = vmatprep.subr.mxu0 0.0
      %194 = vmatpush1.msra.mxu0 0.0
      %195 = vmatprep.subr.mxu0 0.0
      %196 = vmatpush1.msra.mxu0 0.0
      %197 = vmatprep.subr.mxu0 0.0
      %198 = vmatpush1.msra.mxu0 0.0
      %199 = vmatprep.subr.mxu0 0.0
      %200 = vmatpush1.msra.mxu0 0.0
      %201 = vmatprep.subr.mxu0 0.0
      %202 = vmatpush1.msra.mxu0 0.0
      %203 = vmatprep.subr.mxu0 0.0
      %204 = vmatpush1.msra.mxu0 0.0
      %205 = vmatprep.subr.mxu0 0.0
      %206 = vmatpush1.msra.mxu0 0.0
      %207 = vmatprep.subr.mxu0 0.0
      %208 = vmatpush1.msra.mxu0 0.0
      %209 = vmatprep.subr.mxu0 0.0
      %210 = vmatpush1.msra.mxu0 0.0
      %211 = vmatprep.subr.mxu0 0.0
      %212 = vmatpush1.msra.mxu0 0.0
      %213 = vmatprep.subr.mxu0 0.0
      %214 = vmatpush1.msra.mxu0 0.0
      %215 = vmatprep.subr.mxu0 0.0
      %216 = vmatpush1.msra.mxu0 0.0
      %217 = vmatprep.subr.mxu0 0.0
      %218 = vmatpush1.msra.mxu0 0.0
      %219 = vmatprep.subr.mxu0 0.0
      %220 = vmatpush1.msra.mxu0 0.0
      %221 = vmatprep.subr.mxu0 0.0
      %222 = vmatpush1.msra.mxu0 0.0
      %223 = vmatprep.subr.mxu0 0.0
      %224 = vmatpush1.msra.mxu0 0.0
      %225 = vmatprep.subr.mxu0 0.0
      %226 = vmatpush1.msra.mxu0 0.0
      %227 = vmatprep.subr.mxu0 0.0
      %228 = vmatpush1.msra.mxu0 0.0
      %229 = vmatprep.subr.mxu0 0.0
      %230 = vmatpush1.msra.mxu0 0.0
      %231 = vmatprep.subr.mxu0 0.0
      %232 = vmatpush1.msra.mxu0 0.0
      %233 = vmatprep.mubr.f32.mxu0 0.0
      %234 = vmatmul.mubr.f32.gmra.mrb[0].mxu0 %v158
      %v235 = vpop.f32.mrb[0].mxu0
      %v236 = vadd.f32 0.0, %v235
      %v237 = vpop.f32.mrb[0].mxu0
      %v238 = vadd.f32 0.0, %v237
      %239 = vmatprep.mubr.f32.mxu0 0.0
      %240 = vmatmul.mubr.f32.gmra.mrb[0].mxu0 %v161
      %v241 = vpop.f32.mrb[0].mxu0
      %v242 = vadd.f32 0.0, %v241
      %v243 = vpop.f32.mrb[0].mxu0
      %v244 = vadd.f32 0.0, %v243
      %245 = vmatprep.mubr.f32.mxu0 0.0
      %246 = vmatmul.mubr.f32.gmra.mrb[0].mxu0 %v164
      %v247 = vpop.f32.mrb[0].mxu0
      %v248 = vadd.f32 0.0, %v247
      %v249 = vpop.f32.mrb[0].mxu0
      %v250 = vadd.f32 0.0, %v249
      %251 = vmatprep.mubr.f32.mxu0 0.0
      %252 = vmatmul.mubr.f32.gmra.mrb[0].mxu0 %v167
      %v253 = vpop.f32.mrb[0].mxu0
      %v254 = vadd.f32 0.0, %v253
      %v255 = vpop.f32.mrb[0].mxu0
      %v256 = vadd.f32 0.0, %v255
      %257 = vdwg.mxu0
      %258 = vst [vmem:[%s143] sm:$0xff] %v236
      %259 = vst [vmem:[%s143 + $0x8] sm:$0xff] %v238
      %260 = vst [vmem:[%s143 + $0x10] sm:$0xff] %v242
      %261 = vst [vmem:[%s143 + $0x18] sm:$0xff] %v244
      %262 = vst [vmem:[%s143 + $0x20] sm:$0xff] %v248
      %263 = vst [vmem:[%s143 + $0x28] sm:$0xff] %v250
      %264 = vst [vmem:[%s143 + $0x30] sm:$0xff] %v254
      %265 = vst [vmem:[%s143 + $0x38] sm:$0xff] %v256
      %p266 = scmp.lt.s32.totalorder %s13, 1
      %s267 = scalar_select %p266, %s13, 1
      %s268 = smul.addr %s267, 8
      %s269 = smul.addr %s268, 8
      %s270 = scalar_lea.vmem %s2, %s269
      // Predicated region
      $region29: #{model_forward.1} parent=27 // pred_check
        %p271 = pneg %p78
      $region30: #{model_forward.1} parent=27 // pred_check_branch
        %273 = sbr.rel (%p271) target = $region32
      $region31: #{model_forward.1} parent=27 // pred_region
        _
      $region32: #{model_forward.1} parent=27 // pred_fallthru
        _
    $region28: #{model_forward.1} parent=5 // pred_fallthru
      _
    %p274 = scmp.le.s32.totalorder 2, %s8
    // Predicated region
    $region33: #{model_forward.1} parent=5 // pred_check
      %p275 = pneg %p274
    $region34: #{model_forward.1} parent=5 // pred_check_branch
      %277 = sbr.rel (%p275) target = $region36
    $region35: #{model_forward.1} parent=5 // pred_region
      %s278 = ssub.s32 %s8, 2
      // Predicated region
      $region37: #{model_forward.1} parent=35 // pred_check
        %p279 = pneg %p84
      $region38: #{model_forward.1} parent=35 // pred_check_branch
        %281 = sbr.rel (%p279) target = $region40
      $region39: #{model_forward.1} parent=35 // pred_region
        %p282 = scmp.lt.s32.totalorder %s14, 1
        %s283 = scalar_select %p282, %s14, 1
        %s284 = smul.addr %s283, 8
        %s285 = smul.addr %s284, 8
        %s286 = scalar_lea.vmem %s2, %s285
      $region40: #{model_forward.1} parent=35 // pred_fallthru
        _
    $region36: #{model_forward.1} parent=5 // pred_fallthru
      _
  $region6: #{model_forward.1} parent=0 // loop_footer
    %s12 = sadd.s32 1, %s8
  $region7: #{model_forward.1} parent=0 // loop_footer_branch
    %7 = sbr.rel target = $region3
  $region8: #{model_forward.1} parent=0 // loop_exit
    _

</llo_original>
